<compile_context>
chip_gen: v7x
topology: tpu7x:2x2x1
jax: 0.10.0
libtpu: 0.0.40
codegen_flags: <defaults>
</compile_context>

<pallas_src>
import math

import jax
import jax.numpy as jnp
from jax.experimental import pallas as pl
from jax.experimental.pallas import tpu as pltpu


def _round_up(x, m):
    return ((x + m - 1) // m) * m


def si_linear_kernel(ns_ref, x_ref, wt_ref, wnt_ref, b_ref, bn_ref, o_ref, acc_ref):
    # ns_ref: (1,1) f32 scalar in SMEM (noise_std)
    k = pl.program_id(2)

    @pl.when(k == 0)
    def _init():
        acc_ref[...] = jnp.zeros_like(acc_ref)

    ns = ns_ref[0, 0]
    # (tk, tn) tile of W^T + noise: already in MXU-friendly (K, N) layout.
    w_noisy = wt_ref[...] + ns * wnt_ref[...]
    acc_ref[...] += jnp.dot(x_ref[...], w_noisy, preferred_element_type=jnp.float32)

    @pl.when(k == pl.num_programs(2) - 1)
    def _finalize():
        b_noisy = b_ref[...] + ns * bn_ref[...]          # (1, tn)
        o_ref[...] = (acc_ref[...] + b_noisy).astype(o_ref.dtype)


def si_linear(x, weight, bias, weight_noise, bias_noise, noise_std):
    """Pallas forward of SILinear.

    x:            (B, in_features)                 f32
    weight:       (out_features, in_features)      f32  (torch layout)
    bias:         (out_features,)                  f32
    weight_noise: same shape as weight (standard normal samples)
    bias_noise:   same shape as bias   (standard normal samples)
    noise_std:    python/jax scalar
    """
    B, I = x.shape
    O = weight.shape[0]
    f32 = jnp.float32

    # Tile sizes: sublane-aligned M, 128/256-aligned N and K.  Per-step VMEM
    # (double-buffered x/W/Wn tiles + acc) stays well under every chip's limit.
    tm = min(256, _round_up(B, 8))
    tn = min(256, _round_up(O, 128))
    tk = min(512, _round_up(I, 128))
    Bp = _round_up(B, tm)
    Op = _round_up(O, tn)
    Ip = _round_up(I, tk)

    # Pad + pre-transpose (zero padding on the contraction dim contributes 0).
    xp = jnp.zeros((Bp, Ip), f32).at[:B, :I].set(x.astype(f32))
    wt = jnp.zeros((Ip, Op), f32).at[:I, :O].set(weight.T.astype(f32))
    wnt = jnp.zeros((Ip, Op), f32).at[:I, :O].set(weight_noise.T.astype(f32))
    bp = jnp.zeros((1, Op), f32).at[0, :O].set(bias.astype(f32))
    bnp = jnp.zeros((1, Op), f32).at[0, :O].set(bias_noise.astype(f32))
    ns = jnp.asarray(noise_std, f32).reshape(1, 1)

    grid = (Bp // tm, Op // tn, Ip // tk)

    out_p = pl.pallas_call(
        si_linear_kernel,
        out_shape=jax.ShapeDtypeStruct((Bp, Op), x.dtype),
        grid=grid,
        in_specs=[
            pl.BlockSpec(memory_space=pltpu.MemorySpace.SMEM),      # noise_std scalar
            pl.BlockSpec((tm, tk), lambda i, j, k: (i, k)),         # x tile
            pl.BlockSpec((tk, tn), lambda i, j, k: (k, j)),         # W^T tile
            pl.BlockSpec((tk, tn), lambda i, j, k: (k, j)),         # W-noise^T tile
            pl.BlockSpec((1, tn), lambda i, j, k: (0, j)),          # bias tile
            pl.BlockSpec((1, tn), lambda i, j, k: (0, j)),          # bias-noise tile
        ],
        out_specs=pl.BlockSpec((tm, tn), lambda i, j, k: (i, j)),
        scratch_shapes=[pltpu.VMEM((tm, tn), jnp.float32)],
        compiler_params=pltpu.CompilerParams(
            dimension_semantics=("parallel", "parallel", "arbitrary")),
    )(ns, xp, wt, wnt, bp, bnp)

    return out_p[:B, :O]


def _reference(x, weight, bias, weight_noise, bias_noise, noise_std):
    w_noisy = weight + noise_std * weight_noise
    b_noisy = bias + noise_std * bias_noise
    return x @ w_noisy.T + b_noisy[None, :]


def _run_case(key, B, in_features, out_features, noise_std):
    k_x, k_w, k_b, k_wn, k_bn = jax.random.split(key, 5)

    # torch kaiming_uniform_(a=sqrt(5)) on (O, I) -> U(-1/sqrt(fan_in), 1/sqrt(fan_in))
    bound = 1.0 / math.sqrt(in_features)
    weight = jax.random.uniform(
        k_w, (out_features, in_features), jnp.float32, minval=-bound, maxval=bound)
    bias = jax.random.uniform(
        k_b, (out_features,), jnp.float32, minval=-bound, maxval=bound)

    x = jax.random.normal(k_x, (B, in_features), jnp.float32)

    # Fresh Gaussian noise per forward pass (torch.randn_like equivalents).
    weight_noise = jax.random.normal(k_wn, (out_features, in_features), jnp.float32)
    bias_noise = jax.random.normal(k_bn, (out_features,), jnp.float32)

    out = si_linear(x, weight, bias, weight_noise, bias_noise, noise_std)
    out = jax.block_until_ready(out)

    ref = _reference(x, weight, bias, weight_noise, bias_noise, noise_std)
    assert out.shape == (B, out_features)
    assert jnp.allclose(out, ref, atol=1e-4, rtol=1e-4), "mismatch vs reference"


if __name__ == "__main__":
    key = jax.random.PRNGKey(0)
    k1, k2 = jax.random.split(key)

    # Small shape matching the module (single-tile grid after padding).
    _run_case(k1, B=8, in_features=32, out_features=16, noise_std=0.1)

    # Slightly larger, non-aligned shape that exercises the multi-tile grid
    # (j and k axes > 1, padded/sliced edges, accumulator init/finalize path).
    _run_case(k2, B=16, in_features=600, out_features=300, noise_std=0.05)

    print("KERNEL_OK")
</pallas_src>

<mosaic_0001>
module attributes {stable_mosaic.version = 11 : i64} {
  func.func @si_linear_kernel(%arg0: i32, %arg1: i32, %arg2: i32, %arg3: memref<1x1xf32, #tpu.memory_space<smem>>, %arg4: memref<8x128xf32, #tpu.memory_space<vmem>>, %arg5: memref<128x128xf32, #tpu.memory_space<vmem>>, %arg6: memref<128x128xf32, #tpu.memory_space<vmem>>, %arg7: memref<1x128xf32, #tpu.memory_space<vmem>>, %arg8: memref<1x128xf32, #tpu.memory_space<vmem>>, %arg9: memref<8x128xf32, #tpu.memory_space<vmem>>, %arg10: memref<8x128xf32, #tpu.memory_space<vmem>>) attributes {dimension_semantics = [#tpu.dimension_semantics<parallel>, #tpu.dimension_semantics<parallel>, #tpu.dimension_semantics<arbitrary>], iteration_bounds = array<i64: 1, 1, 1>, scalar_prefetch = 0 : i64, scratch_operands = 1 : i64, tpu.core_type = #tpu.core_type<tc>, window_params = [{transform_indices = @transform_0, window_bounds = array<i64: 1, 1>}, {transform_indices = @transform_1, window_bounds = array<i64: 8, 128>}, {transform_indices = @transform_2, window_bounds = array<i64: 128, 128>}, {transform_indices = @transform_3, window_bounds = array<i64: 128, 128>}, {transform_indices = @transform_4, window_bounds = array<i64: 1, 128>}, {transform_indices = @transform_5, window_bounds = array<i64: 1, 128>}, {transform_indices = @transform_6, window_bounds = array<i64: 8, 128>}]} {
    %c0_i32 = arith.constant 0 : i32
    %0 = arith.cmpi eq, %arg2, %c0_i32 : i32
    %1 = arith.extui %0 : i1 to i32
    %c0_i32_0 = arith.constant 0 : i32
    %2 = arith.cmpi ne, %1, %c0_i32_0 : i32
    scf.if %2 {
      %cst_14 = arith.constant 0.000000e+00 : f32
      %17 = vector.broadcast %cst_14 : f32 to vector<8x128xf32>
      %c0_15 = arith.constant 0 : index
      %c0_16 = arith.constant 0 : index
      %18 = vector.load %arg10[%c0_15, %c0_16] : memref<8x128xf32, #tpu.memory_space<vmem>>, vector<8x128xf32>
      tpu.vector_store %arg10[%c0_15, %c0_16], %17 {strides = array<i32>} : memref<8x128xf32, #tpu.memory_space<vmem>>, vector<8x128xf32>,
    } else {
    }
    %c0 = arith.constant 0 : index
    %c0_1 = arith.constant 0 : index
    %3 = memref.load %arg3[%c0, %c0_1] : memref<1x1xf32, #tpu.memory_space<smem>>
    %c0_2 = arith.constant 0 : index
    %c0_3 = arith.constant 0 : index
    %4 = vector.load %arg5[%c0_2, %c0_3] : memref<128x128xf32, #tpu.memory_space<vmem>>, vector<128x128xf32>
    %c0_4 = arith.constant 0 : index
    %c0_5 = arith.constant 0 : index
    %5 = vector.load %arg6[%c0_4, %c0_5] : memref<128x128xf32, #tpu.memory_space<vmem>>, vector<128x128xf32>
    %6 = vector.broadcast %3 : f32 to vector<128x128xf32>
    %7 = arith.mulf %6, %5 : vector<128x128xf32>
    %8 = arith.addf %4, %7 : vector<128x128xf32>
    %c0_6 = arith.constant 0 : index
    %c0_7 = arith.constant 0 : index
    %9 = vector.load %arg10[%c0_6, %c0_7] : memref<8x128xf32, #tpu.memory_space<vmem>>, vector<8x128xf32>
    %c0_8 = arith.constant 0 : index
    %c0_9 = arith.constant 0 : index
    %10 = vector.load %arg4[%c0_8, %c0_9] : memref<8x128xf32, #tpu.memory_space<vmem>>, vector<8x128xf32>
    %cst = arith.constant dense<0.000000e+00> : vector<8x128xf32>
    %11 = tpu.matmul %10, %8, %cst {dimension_numbers = #tpu.dot_dimension_numbers<[1], [0], [0], [1], [0, 0, 1, 1], [], []>} : vector<8x128xf32>, vector<128x128xf32>, vector<8x128xf32> -> vector<8x128xf32>
    %12 = arith.addf %9, %11 : vector<8x128xf32>
    %c0_10 = arith.constant 0 : index
    %c0_11 = arith.constant 0 : index
    %13 = vector.load %arg10[%c0_10, %c0_11] : memref<8x128xf32, #tpu.memory_space<vmem>>, vector<8x128xf32>
    tpu.vector_store %arg10[%c0_10, %c0_11], %12 {strides = array<i32>} : memref<8x128xf32, #tpu.memory_space<vmem>>, vector<8x128xf32>,
    %c0_i32_12 = arith.constant 0 : i32
    %14 = arith.cmpi eq, %arg2, %c0_i32_12 : i32
    %15 = arith.extui %14 : i1 to i32
    %c0_i32_13 = arith.constant 0 : i32
    %16 = arith.cmpi ne, %15, %c0_i32_13 : i32
    scf.if %16 {
      %c0_14 = arith.constant 0 : index
      %c0_15 = arith.constant 0 : index
      %17 = vector.load %arg7[%c0_14, %c0_15] : memref<1x128xf32, #tpu.memory_space<vmem>>, vector<1x128xf32>
      %c0_16 = arith.constant 0 : index
      %c0_17 = arith.constant 0 : index
      %18 = vector.load %arg8[%c0_16, %c0_17] : memref<1x128xf32, #tpu.memory_space<vmem>>, vector<1x128xf32>
      %19 = vector.broadcast %3 : f32 to vector<1x128xf32>
      %20 = arith.mulf %19, %18 : vector<1x128xf32>
      %21 = arith.addf %17, %20 : vector<1x128xf32>
      %c0_18 = arith.constant 0 : index
      %c0_19 = arith.constant 0 : index
      %22 = vector.load %arg10[%c0_18, %c0_19] : memref<8x128xf32, #tpu.memory_space<vmem>>, vector<8x128xf32>
      %23 = vector.broadcast %21 : vector<1x128xf32> to vector<8x128xf32>
      %24 = arith.addf %22, %23 : vector<8x128xf32>
      %c0_20 = arith.constant 0 : index
      %c0_21 = arith.constant 0 : index
      %25 = vector.load %arg9[%c0_20, %c0_21] : memref<8x128xf32, #tpu.memory_space<vmem>>, vector<8x128xf32>
      tpu.vector_store %arg9[%c0_20, %c0_21], %24 {strides = array<i32>} : memref<8x128xf32, #tpu.memory_space<vmem>>, vector<8x128xf32>,
    } else {
    }
    return
  }
  func.func @transform_0(%arg0: i32, %arg1: i32, %arg2: i32) -> (i32, i32) {
    %c0_i32 = arith.constant 0 : i32
    %c0_i32_0 = arith.constant 0 : i32
    %c0_i32_1 = arith.constant 0 : i32
    return %c0_i32, %c0_i32_0 : i32, i32
  }
  func.func @transform_1(%arg0: i32, %arg1: i32, %arg2: i32) -> (i32, i32) {
    %c0_i32 = arith.constant 0 : i32
    return %arg0, %arg2 : i32, i32
  }
  func.func @transform_2(%arg0: i32, %arg1: i32, %arg2: i32) -> (i32, i32) {
    %c0_i32 = arith.constant 0 : i32
    return %arg2, %arg1 : i32, i32
  }
  func.func @transform_3(%arg0: i32, %arg1: i32, %arg2: i32) -> (i32, i32) {
    %c0_i32 = arith.constant 0 : i32
    return %arg2, %arg1 : i32, i32
  }
  func.func @transform_4(%arg0: i32, %arg1: i32, %arg2: i32) -> (i32, i32) {
    %c0_i32 = arith.constant 0 : i32
    %c0_i32_0 = arith.constant 0 : i32
    return %c0_i32, %arg1 : i32, i32
  }
  func.func @transform_5(%arg0: i32, %arg1: i32, %arg2: i32) -> (i32, i32) {
    %c0_i32 = arith.constant 0 : i32
    %c0_i32_0 = arith.constant 0 : i32
    return %c0_i32, %arg1 : i32, i32
  }
  func.func @transform_6(%arg0: i32, %arg1: i32, %arg2: i32) -> (i32, i32) {
    %c0_i32 = arith.constant 0 : i32
    return %arg0, %arg1 : i32, i32
  }
}

</mosaic_0001>

<llo_original>
// kernel: tpu_custom_call.1
$region0: #{tpu_custom_call.1}
  #allocation0 [shape = 'u32[]', space=smem, size = 0x4, offset = 0x4, fixed_abs, tag = 'smem constant byte address 0x4 - core index']
  #allocation1 [shape = 'u32[144,128]{1,0:T(1,128)}', space=vmem, size = 0x12000, scoped, tag = 'internal scratch']
  #allocation2 [shape = 'f32[8,128]{1,0:T(8,128)}', space=vmem, size = 0x1000, scoped, tag = 'scratch operand']
  #allocation3 [shape = 'f32[1,1]{1,0:T(1,128)S(6)}', space=smem, size = 0x200, scoped, tag = 'scoped memory for tpu_custom_call.1']
  %s0 = inlined_call_operand.<no memory space> [shape: f32[1,1], index: 0, kind: input, shape index: {}]
  %s1 = inlined_call_operand.hbm [shape: f32[8,128], index: 1, kind: input, shape index: {}]
  %s2 = inlined_call_operand.hbm [shape: f32[128,128], index: 2, kind: input, shape index: {}]
  %s3 = inlined_call_operand.hbm [shape: f32[128,128], index: 3, kind: input, shape index: {}]
  %s4 = inlined_call_operand.vmem [shape: f32[1,128], index: 4, kind: input, shape index: {}]
  %s5 = inlined_call_operand.vmem [shape: f32[1,128], index: 5, kind: input, shape index: {}]
  %s6 = inlined_call_operand.hbm [shape: f32[8,128], index: 6, kind: output, shape index: {}]
  %s7 = sld [smem:[#allocation0]]
  $region54: #{tpu_custom_call.1} parent=0
    _
  %s9 = ssub.s32 1, %s7
  %s10 = scalar_select 0, %s9, %s7
  %11 = sst [smem:[#allocation3]] %s0
  $region1: #{tpu_custom_call.1} parent=0
    #allocation4 [shape = 'u8[4096]{0}', space=vmem, size = 0x1000, scoped, tag = 'input window, operand 1, single buffered']
    #allocation5 [shape = 's32[1]{0}', space=sflag, size = 0x4, scoped, tag = 'scoped memory for tpu_custom_call.1']
    #allocation6 [shape = 's32[1]{0}', space=sflag, size = 0x4, scoped, tag = 'scoped memory for tpu_custom_call.1']
    #allocation7 [shape = 'u8[65536]{0}', space=vmem, size = 0x10000, scoped, tag = 'input window, operand 2, single buffered']
    #allocation8 [shape = 's32[1]{0}', space=sflag, size = 0x4, scoped, tag = 'scoped memory for tpu_custom_call.1']
    #allocation9 [shape = 'u8[65536]{0}', space=vmem, size = 0x10000, scoped, tag = 'input window, operand 3, single buffered']
    #allocation10 [shape = 'u8[4096]{0}', space=vmem, size = 0x1000, scoped, tag = 'output window, operand 0, single buffered']
    %12 = vsyncpa [#allocation5], 0
    %13 = vsyncpa [#allocation8], 0
    %14 = vsyncpa [#allocation6], 0
    // Predicated region
    $region2: #{tpu_custom_call.1} parent=1 // pred_check
      _
    $region3: #{tpu_custom_call.1} parent=1 // pred_check_branch
      %16 = sbr.rel (0) target = $region5
    $region4: #{tpu_custom_call.1} parent=1 // pred_region
      _
    $region5: #{tpu_custom_call.1} parent=1 // pred_fallthru
      _
    // Predicated region
    $region6: #{tpu_custom_call.1} parent=1 // pred_check
      _
    $region7: #{tpu_custom_call.1} parent=1 // pred_check_branch
      %18 = sbr.rel (0) target = $region9
    $region8: #{tpu_custom_call.1} parent=1 // pred_region
      %s20 = ssub.s32 128, 128
      %21 = vsyncadd [#allocation5], %s20
      %s23 = sshll.u32 [#allocation4], 4
      %s24 = int_to_ptr.vmem [resolvable:$true] %s23
      %26 = dma.hbm_to_vmem [thread:$0]  %s1, 128, %s24, [#allocation5]
    $region9: #{tpu_custom_call.1} parent=1 // pred_fallthru
      _
    // Predicated region
    $region10: #{tpu_custom_call.1} parent=1 // pred_check
      _
    $region11: #{tpu_custom_call.1} parent=1 // pred_check_branch
      %28 = sbr.rel (0) target = $region13
    $region12: #{tpu_custom_call.1} parent=1 // pred_region
      %s30 = ssub.s32 2048, 2048
      %31 = vsyncadd [#allocation8], %s30
      %s32 = sshll.u32 [#allocation7], 4
      %s33 = int_to_ptr.vmem [resolvable:$true] %s32
      %38 = dma.hbm_to_vmem [thread:$0]  %s2, 2048, %s33, [#allocation8], 128, 128, 8
    $region13: #{tpu_custom_call.1} parent=1 // pred_fallthru
      _
    // Predicated region
    $region14: #{tpu_custom_call.1} parent=1 // pred_check
      _
    $region15: #{tpu_custom_call.1} parent=1 // pred_check_branch
      %40 = sbr.rel (0) target = $region17
    $region16: #{tpu_custom_call.1} parent=1 // pred_region
      %s42 = ssub.s32 2048, 2048
      %43 = vsyncadd [#allocation8], %s42
      %s44 = sshll.u32 [#allocation9], 4
      %s45 = int_to_ptr.vmem [resolvable:$true] %s44
      %50 = dma.hbm_to_vmem [thread:$0]  %s3, 2048, %s45, [#allocation8], 128, 128, 8
    $region17: #{tpu_custom_call.1} parent=1 // pred_fallthru
      _
    // Predicated region
    $region18: #{tpu_custom_call.1} parent=1 // pred_check
      _
    $region19: #{tpu_custom_call.1} parent=1 // pred_check_branch
      %52 = sbr.rel (0) target = $region21
    $region20: #{tpu_custom_call.1} parent=1 // pred_region
      _
    $region21: #{tpu_custom_call.1} parent=1 // pred_fallthru
      _
    // Predicated region
    $region22: #{tpu_custom_call.1} parent=1 // pred_check
      _
    $region23: #{tpu_custom_call.1} parent=1 // pred_check_branch
      %54 = sbr.rel (0) target = $region25
    $region24: #{tpu_custom_call.1} parent=1 // pred_region
      _
    $region25: #{tpu_custom_call.1} parent=1 // pred_fallthru
      _
    // Predicated region
    $region26: #{tpu_custom_call.1} parent=1 // pred_check
      _
    $region27: #{tpu_custom_call.1} parent=1 // pred_check_branch
      %56 = sbr.rel (0) target = $region29
    $region28: #{tpu_custom_call.1} parent=1 // pred_region
      %57 = dma.done [#allocation5], 128
    $region29: #{tpu_custom_call.1} parent=1 // pred_fallthru
      _
    // Predicated region
    $region30: #{tpu_custom_call.1} parent=1 // pred_check
      _
    $region31: #{tpu_custom_call.1} parent=1 // pred_check_branch
      %59 = sbr.rel (0) target = $region33
    $region32: #{tpu_custom_call.1} parent=1 // pred_region
      %60 = dma.done [#allocation8], 2048
    $region33: #{tpu_custom_call.1} parent=1 // pred_fallthru
      _
    // Predicated region
    $region34: #{tpu_custom_call.1} parent=1 // pred_check
      _
    $region35: #{tpu_custom_call.1} parent=1 // pred_check_branch
      %62 = sbr.rel (0) target = $region37
    $region36: #{tpu_custom_call.1} parent=1 // pred_region
      %63 = dma.done [#allocation8], 2048
    $region37: #{tpu_custom_call.1} parent=1 // pred_fallthru
      _
    %p64 = scmp.eq.s32.totalorder 0, 0
    // Predicated region
    $region38: #{tpu_custom_call.1} parent=1 // pred_check
      %p65 = pneg %p64
    $region39: #{tpu_custom_call.1} parent=1 // pred_check_branch
      %67 = sbr.rel (%p65) target = $region41
    $region40: #{tpu_custom_call.1} parent=1 // pred_region
      %68 = vst [vmem:[#allocation2] sm:$0xff] 0.0
    $region41: #{tpu_custom_call.1} parent=1 // pred_fallthru
      _
    %s69 = sld [smem:[#allocation3]]
    %v70 = vld [vmem:[#allocation7] sm:$0xff]
    %v71 = vld [vmem:[#allocation7 + $0x8] sm:$0xff]
    %v72 = vld [vmem:[#allocation7 + $0x10] sm:$0xff]
    %v73 = vld [vmem:[#allocation7 + $0x18] sm:$0xff]
    %v74 = vld [vmem:[#allocation7 + $0x20] sm:$0xff]
    %v75 = vld [vmem:[#allocation7 + $0x28] sm:$0xff]
    %v76 = vld [vmem:[#allocation7 + $0x30] sm:$0xff]
    %v77 = vld [vmem:[#allocation7 + $0x38] sm:$0xff]
    %v78 = vld [vmem:[#allocation7 + $0x40] sm:$0xff]
    %v79 = vld [vmem:[#allocation7 + $0x48] sm:$0xff]
    %v80 = vld [vmem:[#allocation7 + $0x50] sm:$0xff]
    %v81 = vld [vmem:[#allocation7 + $0x58] sm:$0xff]
    %v82 = vld [vmem:[#allocation7 + $0x60] sm:$0xff]
    %v83 = vld [vmem:[#allocation7 + $0x68] sm:$0xff]
    %v84 = vld [vmem:[#allocation7 + $0x70] sm:$0xff]
    %v85 = vld [vmem:[#allocation7 + $0x78] sm:$0xff]
    %v86 = vld [vmem:[#allocation9] sm:$0xff]
    %v87 = vld [vmem:[#allocation9 + $0x8] sm:$0xff]
    %v88 = vld [vmem:[#allocation9 + $0x10] sm:$0xff]
    %v89 = vld [vmem:[#allocation9 + $0x18] sm:$0xff]
    %v90 = vld [vmem:[#allocation9 + $0x20] sm:$0xff]
    %v91 = vld [vmem:[#allocation9 + $0x28] sm:$0xff]
    %v92 = vld [vmem:[#allocation9 + $0x30] sm:$0xff]
    %v93 = vld [vmem:[#allocation9 + $0x38] sm:$0xff]
    %v94 = vld [vmem:[#allocation9 + $0x40] sm:$0xff]
    %v95 = vld [vmem:[#allocation9 + $0x48] sm:$0xff]
    %v96 = vld [vmem:[#allocation9 + $0x50] sm:$0xff]
    %v97 = vld [vmem:[#allocation9 + $0x58] sm:$0xff]
    %v98 = vld [vmem:[#allocation9 + $0x60] sm:$0xff]
    %v99 = vld [vmem:[#allocation9 + $0x68] sm:$0xff]
    %v100 = vld [vmem:[#allocation9 + $0x70] sm:$0xff]
    %v101 = vld [vmem:[#allocation9 + $0x78] sm:$0xff]
    %v102 = vstv %s69
    %v103 = vmul.f32 %v102, %v86
    %v104 = vmul.f32 %v102, %v87
    %v105 = vmul.f32 %v102, %v88
    %v106 = vmul.f32 %v102, %v89
    %v107 = vmul.f32 %v102, %v90
    %v108 = vmul.f32 %v102, %v91
    %v109 = vmul.f32 %v102, %v92
    %v110 = vmul.f32 %v102, %v93
    %v111 = vmul.f32 %v102, %v94
    %v112 = vmul.f32 %v102, %v95
    %v113 = vmul.f32 %v102, %v96
    %v114 = vmul.f32 %v102, %v97
    %v115 = vmul.f32 %v102, %v98
    %v116 = vmul.f32 %v102, %v99
    %v117 = vmul.f32 %v102, %v100
    %v118 = vmul.f32 %v102, %v101
    %v119 = vadd.f32 %v70, %v103
    %v120 = vadd.f32 %v71, %v104
    %v121 = vadd.f32 %v72, %v105
    %v122 = vadd.f32 %v73, %v106
    %v123 = vadd.f32 %v74, %v107
    %v124 = vadd.f32 %v75, %v108
    %v125 = vadd.f32 %v76, %v109
    %v126 = vadd.f32 %v77, %v110
    %v127 = vadd.f32 %v78, %v111
    %v128 = vadd.f32 %v79, %v112
    %v129 = vadd.f32 %v80, %v113
    %v130 = vadd.f32 %v81, %v114
    %v131 = vadd.f32 %v82, %v115
    %v132 = vadd.f32 %v83, %v116
    %v133 = vadd.f32 %v84, %v117
    %v134 = vadd.f32 %v85, %v118
    %v135 = vld [vmem:[#allocation2] sm:$0xff]
    %v136 = vld [vmem:[#allocation4] sm:$0xff]
    %137 = vmatprep.subr.mxu0 0.0
    %138 = vmatpush1.msra.mxu0 %v119
    %139 = vmatprep.subr.mxu0 0.0
    %140 = vmatpush1.msra.mxu0 %v120
    %141 = vmatprep.subr.mxu0 0.0
    %142 = vmatpush1.msra.mxu0 %v121
    %143 = vmatprep.subr.mxu0 0.0
    %144 = vmatpush1.msra.mxu0 %v122
    %145 = vmatprep.subr.mxu0 0.0
    %146 = vmatpush1.msra.mxu0 %v123
    %147 = vmatprep.subr.mxu0 0.0
    %148 = vmatpush1.msra.mxu0 %v124
    %149 = vmatprep.subr.mxu0 0.0
    %150 = vmatpush1.msra.mxu0 %v125
    %151 = vmatprep.subr.mxu0 0.0
    %152 = vmatpush1.msra.mxu0 %v126
    %153 = vmatprep.subr.mxu0 0.0
    %154 = vmatpush1.msra.mxu0 %v127
    %155 = vmatprep.subr.mxu0 0.0
    %156 = vmatpush1.msra.mxu0 %v128
    %157 = vmatprep.subr.mxu0 0.0
    %158 = vmatpush1.msra.mxu0 %v129
    %159 = vmatprep.subr.mxu0 0.0
    %160 = vmatpush1.msra.mxu0 %v130
    %161 = vmatprep.subr.mxu0 0.0
    %162 = vmatpush1.msra.mxu0 %v131
    %163 = vmatprep.subr.mxu0 0.0
    %164 = vmatpush1.msra.mxu0 %v132
    %165 = vmatprep.subr.mxu0 0.0
    %166 = vmatpush1.msra.mxu0 %v133
    %167 = vmatprep.subr.mxu0 0.0
    %168 = vmatpush1.msra.mxu0 %v134
    %169 = vmatprep.subr.mxu0 0.0
    %170 = vmatpush1.msra.mxu0 0.0
    %171 = vmatprep.subr.mxu0 0.0
    %172 = vmatpush1.msra.mxu0 0.0
    %173 = vmatprep.subr.mxu0 0.0
    %174 = vmatpush1.msra.mxu0 0.0
    %175 = vmatprep.subr.mxu0 0.0
    %176 = vmatpush1.msra.mxu0 0.0
    %177 = vmatprep.subr.mxu0 0.0
    %178 = vmatpush1.msra.mxu0 0.0
    %179 = vmatprep.subr.mxu0 0.0
    %180 = vmatpush1.msra.mxu0 0.0
    %181 = vmatprep.subr.mxu0 0.0
    %182 = vmatpush1.msra.mxu0 0.0
    %183 = vmatprep.subr.mxu0 0.0
    %184 = vmatpush1.msra.mxu0 0.0
    %185 = vmatprep.subr.mxu0 0.0
    %186 = vmatpush1.msra.mxu0 0.0
    %187 = vmatprep.subr.mxu0 0.0
    %188 = vmatpush1.msra.mxu0 0.0
    %189 = vmatprep.subr.mxu0 0.0
    %190 = vmatpush1.msra.mxu0 0.0
    %191 = vmatprep.subr.mxu0 0.0
    %192 = vmatpush1.msra.mxu0 0.0
    %193 = vmatprep.subr.mxu0 0.0
    %194 = vmatpush1.msra.mxu0 0.0
    %195 = vmatprep.subr.mxu0 0.0
    %196 = vmatpush1.msra.mxu0 0.0
    %197 = vmatprep.subr.mxu0 0.0
    %198 = vmatpush1.msra.mxu0 0.0
    %199 = vmatprep.subr.mxu0 0.0
    %200 = vmatpush1.msra.mxu0 0.0
    %201 = vmatprep.mubr.f32.mxu0 0.0
    %202 = vmatmul.mubr.f32.gmra.mrb[0].mxu0 %v136
    %v203 = vpop.f32.mrb[0].mxu0
    %v204 = vadd.f32 0.0, %v203
    %v205 = vpop.f32.mrb[0].mxu0
    %206 = vdwg.mxu0
    %v207 = vadd.f32 %v135, %v204
    %208 = vst [vmem:[#allocation2] sm:$0xff] %v207
    // Predicated region
    $region42: #{tpu_custom_call.1} parent=1 // pred_check
      %p209 = pneg %p64
    $region43: #{tpu_custom_call.1} parent=1 // pred_check_branch
      %211 = sbr.rel (%p209) target = $region45
    $region44: #{tpu_custom_call.1} parent=1 // pred_region
      %v212 = vld [vmem:[%s4] sm:$0x1]
      %v213 = vld [vmem:[%s5] sm:$0x1]
      %v214 = vmul.f32 %v102, %v213
      %v215 = vadd.f32 %v212, %v214
      %v216 = vld [vmem:[#allocation2] sm:$0xff]
      %v218 = vlaneseq
      %v219 = vshrl.u32 %v218, 7
      %v220 = vsub.s32 0, %v219
      %v221 = vrot.slane %v215, %v220
      %v223 = vadd.f32 %v216, %v221
      %224 = vst [vmem:[#allocation10] sm:$0xff] %v223
    $region45: #{tpu_custom_call.1} parent=1 // pred_fallthru
      _
    // Predicated region
    $region46: #{tpu_custom_call.1} parent=1 // pred_check
      _
    $region47: #{tpu_custom_call.1} parent=1 // pred_check_branch
      %226 = sbr.rel (0) target = $region49
    $region48: #{tpu_custom_call.1} parent=1 // pred_region
      %s228 = ssub.s32 128, 128
      %229 = vsyncadd [#allocation6], %s228
      %s231 = sshll.u32 [#allocation10], 4
      %s232 = int_to_ptr.vmem [resolvable:$true] %s231
      %234 = dma.vmem_to_hbm [thread:$0]  %s232, 128, %s6, [#allocation6]
    $region49: #{tpu_custom_call.1} parent=1 // pred_fallthru
      _
    // Predicated region
    $region50: #{tpu_custom_call.1} parent=1 // pred_check
      _
    $region51: #{tpu_custom_call.1} parent=1 // pred_check_branch
      %236 = sbr.rel (0) target = $region53
    $region52: #{tpu_custom_call.1} parent=1 // pred_region
      %237 = dma.done [#allocation6], 128
    $region53: #{tpu_custom_call.1} parent=1 // pred_fallthru
      _
    %238 = vsyncpa [#allocation5], 1
    %239 = vsyncpa [#allocation8], 1
    %240 = vsyncpa [#allocation6], 1

</llo_original>
